<compile_context>
chip_gen: v5e
topology: v5e:2x2
jax: 0.10.0
libtpu: 0.0.40
codegen_flags: <defaults>
</compile_context>

<pallas_src>
import functools
import math

import jax
import jax.numpy as jnp
from jax import lax
from jax.experimental import pallas as pl
from jax.experimental.pallas import tpu as pltpu

LANES = 128
DEFAULT_MAX_BLOCK_ROWS = 4096   # (4096, 128) f32 block = 2 MiB
VMEM_LIMIT_BYTES = 32 * 1024 * 1024


def _charb_sum_kernel(*refs, eps, tail_rows, has_weight):
    """acc_ref[...] += sqrt((p-t)^2 + eps) [* w], block-resident accumulator."""
    if has_weight:
        p_ref, t_ref, w_ref, acc_ref = refs
    else:
        p_ref, t_ref, acc_ref = refs
        w_ref = None

    i = pl.program_id(0)
    last = pl.num_programs(0) - 1

    d = p_ref[...].astype(jnp.float32) - t_ref[...].astype(jnp.float32)
    v = jnp.sqrt(d * d + eps)
    if w_ref is not None:
        v = v * w_ref[...].astype(jnp.float32)

    @pl.when(i == 0)
    def _():
        acc_ref[...] = jnp.zeros_like(acc_ref)

    if tail_rows == 0:
        # Every block is fully valid -> plain vector accumulate, no masking.
        acc_ref[...] += v
    else:
        @pl.when(i < last)
        def _():
            acc_ref[...] += v

        @pl.when(i == last)
        def _():
            # Only the final (partial) block needs masking of the OOB rows.
            row = lax.broadcasted_iota(jnp.int32, v.shape, 0)
            acc_ref[...] += jnp.where(row < tail_rows, v, 0.0)


def _charb_elem_kernel(*refs, eps, has_weight):
    """Elementwise sqrt((p-t)^2 + eps) [* w]   (reduction='none' path)."""
    if has_weight:
        p_ref, t_ref, w_ref, o_ref = refs
    else:
        p_ref, t_ref, o_ref = refs
        w_ref = None

    d = p_ref[...].astype(jnp.float32) - t_ref[...].astype(jnp.float32)
    v = jnp.sqrt(d * d + eps)
    if w_ref is not None:
        v = v * w_ref[...].astype(jnp.float32)
    o_ref[...] = v.astype(o_ref.dtype)


def _as_rows(x, rows):
    """Flatten to (rows, 128); pads (rarely) only when numel % 1024 != 0."""
    flat = x.reshape(-1)
    pad = rows * LANES - flat.shape[0]
    if pad:
        flat = jnp.pad(flat, (0, pad))
    return flat.reshape(rows, LANES)


class CharbonnierLoss:
    """JAX/Pallas port of basicsr CharbonnierLoss (forward only)."""

    def __init__(self, loss_weight=1.0, reduction='mean', eps=1e-12,
                 max_block_rows=DEFAULT_MAX_BLOCK_ROWS):
        if reduction not in ('none', 'mean', 'sum'):
            raise ValueError(f'Unsupported reduction mode: {reduction}.')
        if max_block_rows % 8 != 0:
            raise ValueError('max_block_rows must be a multiple of 8.')
        self.loss_weight = loss_weight
        self.reduction = reduction
        self.eps = eps
        self.max_block_rows = max_block_rows

    def __call__(self, pred, target, weight=None):
        total = int(pred.size)
        unit = 8 * LANES                        # minimal (8,128) tile
        rows = ((total + unit - 1) // unit) * 8
        block_rows = min(self.max_block_rows, rows)
        grid = ((rows + block_rows - 1) // block_rows,)
        tail_rows = rows % block_rows           # valid rows in last block (0 = full)
        pad_count = rows * LANES - total        # lane-tail zero padding (< 1024)

        has_weight = weight is not None
        operands = [_as_rows(pred, rows), _as_rows(target, rows)]
        if has_weight:
            # basicsr allows (N,1,H,W) weights: broadcast to pred's shape.
            w_full = jnp.broadcast_to(weight, pred.shape)
            operands.append(_as_rows(w_full, rows))

        blk = pl.BlockSpec((block_rows, LANES), lambda i: (i, 0))
        in_specs = [blk] * len(operands)

        if self.reduction == 'none':
            dtypes = [pred.dtype, target.dtype] + ([weight.dtype] if has_weight else [])
            out_dtype = jnp.result_type(*dtypes)
            kern = functools.partial(_charb_elem_kernel, eps=self.eps,
                                     has_weight=has_weight)
            out = pl.pallas_call(
                kern,
                out_shape=jax.ShapeDtypeStruct((rows, LANES), out_dtype),
                grid=grid,
                in_specs=in_specs,
                out_specs=blk,
                compiler_params=pltpu.CompilerParams(
                    dimension_semantics=("parallel",),
                    vmem_limit_bytes=VMEM_LIMIT_BYTES),
            )(*operands)
            out = out.reshape(-1)[:total].reshape(pred.shape)
            return self.loss_weight * out

        # 'mean' / 'sum': block-resident vector accumulator across the grid.
        kern = functools.partial(_charb_sum_kernel, eps=self.eps,
                                 tail_rows=tail_rows, has_weight=has_weight)
        partials = pl.pallas_call(
            kern,
            out_shape=jax.ShapeDtypeStruct((block_rows, LANES), jnp.float32),
            grid=grid,
            in_specs=in_specs,
            out_specs=pl.BlockSpec((block_rows, LANES), lambda i: (0, 0)),
            compiler_params=pltpu.CompilerParams(
                dimension_semantics=("arbitrary",),
                vmem_limit_bytes=VMEM_LIMIT_BYTES),
        )(*operands)
        s = jnp.sum(partials)

        # Lane-tail zero padding contributed sqrt(0 + eps) per pad element in
        # the unweighted case; padded weights are zero so no correction there.
        if pad_count and not has_weight:
            s = s - pad_count * math.sqrt(self.eps)

        if self.reduction == 'sum':
            return self.loss_weight * s

        # reduction == 'mean'
        if not has_weight:
            return self.loss_weight * s / total
        # basicsr weight_reduce_loss semantics for weighted 'mean'.
        c = pred.shape[1]
        if weight.shape[1] > 1:
            denom = jnp.sum(weight)
        else:
            denom = jnp.sum(weight) * c
        return self.loss_weight * s / denom


if __name__ == "__main__":
    key = jax.random.PRNGKey(0)
    k1, k2, k3 = jax.random.split(key, 3)
    eps = 1e-12

    # (N, C, H, W) as in the PyTorch module docstring.
    pred = jax.random.normal(k1, (2, 4, 16, 16), dtype=jnp.float32)
    target = jax.random.normal(k2, (2, 4, 16, 16), dtype=jnp.float32)

    # --- default: mean reduction, no weight ---
    loss = CharbonnierLoss(loss_weight=1.0, reduction='mean', eps=eps)(pred, target)
    loss = jax.block_until_ready(loss)
    ref = jnp.mean(jnp.sqrt((pred - target) ** 2 + eps))
    assert jnp.allclose(loss, ref, rtol=1e-5, atol=1e-6), (loss, ref)

    # --- 'none' reduction with elementwise weight ---
    weight = jax.random.uniform(k3, pred.shape, dtype=jnp.float32)
    out = CharbonnierLoss(loss_weight=0.5, reduction='none', eps=eps)(pred, target, weight)
    out = jax.block_until_ready(out)
    ref_none = 0.5 * jnp.sqrt((pred - target) ** 2 + eps) * weight
    assert out.shape == pred.shape
    assert jnp.allclose(out, ref_none, rtol=1e-5, atol=1e-6)

    # --- weighted 'mean' ---
    wmean = CharbonnierLoss(reduction='mean', eps=eps)(pred, target, weight)
    wmean = jax.block_until_ready(wmean)
    ref_wmean = jnp.sum(jnp.sqrt((pred - target) ** 2 + eps) * weight) / jnp.sum(weight)
    assert jnp.allclose(wmean, ref_wmean, rtol=1e-5, atol=1e-6), (wmean, ref_wmean)

    # --- 'sum' on a multi-block, non-aligned size (exercises tail masking +
    #     lane-pad correction) using a small block override to keep shapes small ---
    kp, kt = jax.random.split(k3)
    p2 = jax.random.normal(kp, (2, 3, 211, 211), dtype=jnp.float32)
    t2 = jax.random.normal(kt, (2, 3, 211, 211), dtype=jnp.float32)
    ssum = CharbonnierLoss(reduction='sum', eps=eps, max_block_rows=512)(p2, t2)
    ssum = jax.block_until_ready(ssum)
    ref_sum = jnp.sum(jnp.sqrt((p2 - t2) ** 2 + eps))
    assert jnp.allclose(ssum, ref_sum, rtol=1e-3), (ssum, ref_sum)

    # --- 'sum' with the default (large) block size, single block ---
    ssum2 = CharbonnierLoss(reduction='sum', eps=eps)(p2, t2)
    ssum2 = jax.block_until_ready(ssum2)
    assert jnp.allclose(ssum2, ref_sum, rtol=1e-3), (ssum2, ref_sum)

    print("KERNEL_OK")
</pallas_src>

<mosaic_0001>
module attributes {stable_mosaic.version = 11 : i64} {
  func.func @_charb_sum_kernel(%arg0: i32, %arg1: memref<16x128xf32, #tpu.memory_space<vmem>>, %arg2: memref<16x128xf32, #tpu.memory_space<vmem>>, %arg3: memref<16x128xf32, #tpu.memory_space<vmem>>) attributes {dimension_semantics = [#tpu.dimension_semantics<arbitrary>], iteration_bounds = array<i64: 1>, scalar_prefetch = 0 : i64, scratch_operands = 0 : i64, tpu.core_type = #tpu.core_type<tc>, window_params = [{transform_indices = @transform_0, window_bounds = array<i64: 16, 128>}, {transform_indices = @transform_1, window_bounds = array<i64: 16, 128>}, {pipeline_mode = #tpu.pipeline_mode<synchronous>, transform_indices = @transform_2, window_bounds = array<i64: 16, 128>}]} {
    %c0 = arith.constant 0 : index
    %c0_0 = arith.constant 0 : index
    %0 = vector.load %arg1[%c0, %c0_0] : memref<16x128xf32, #tpu.memory_space<vmem>>, vector<16x128xf32>
    %c0_1 = arith.constant 0 : index
    %c0_2 = arith.constant 0 : index
    %1 = vector.load %arg2[%c0_1, %c0_2] : memref<16x128xf32, #tpu.memory_space<vmem>>, vector<16x128xf32>
    %2 = arith.subf %0, %1 : vector<16x128xf32>
    %3 = arith.mulf %2, %2 : vector<16x128xf32>
    %cst = arith.constant 9.99999996E-13 : f32
    %4 = vector.broadcast %cst : f32 to vector<16x128xf32>
    %5 = arith.addf %3, %4 : vector<16x128xf32>
    %6 = math.sqrt %5 : vector<16x128xf32>
    %c0_i32 = arith.constant 0 : i32
    %7 = arith.cmpi eq, %arg0, %c0_i32 : i32
    %8 = arith.extui %7 : i1 to i32
    %c0_i32_3 = arith.constant 0 : i32
    %9 = arith.cmpi ne, %8, %c0_i32_3 : i32
    scf.if %9 {
      %cst_8 = arith.constant 0.000000e+00 : f32
      %13 = vector.broadcast %cst_8 : f32 to vector<16x128xf32>
      %c0_9 = arith.constant 0 : index
      %c0_10 = arith.constant 0 : index
      %14 = vector.load %arg3[%c0_9, %c0_10] : memref<16x128xf32, #tpu.memory_space<vmem>>, vector<16x128xf32>
      tpu.vector_store %arg3[%c0_9, %c0_10], %13 {strides = array<i32>} : memref<16x128xf32, #tpu.memory_space<vmem>>, vector<16x128xf32>,
    } else {
    }
    %c0_4 = arith.constant 0 : index
    %c0_5 = arith.constant 0 : index
    %10 = vector.load %arg3[%c0_4, %c0_5] : memref<16x128xf32, #tpu.memory_space<vmem>>, vector<16x128xf32>
    %11 = arith.addf %10, %6 : vector<16x128xf32>
    %c0_6 = arith.constant 0 : index
    %c0_7 = arith.constant 0 : index
    %12 = vector.load %arg3[%c0_6, %c0_7] : memref<16x128xf32, #tpu.memory_space<vmem>>, vector<16x128xf32>
    tpu.vector_store %arg3[%c0_6, %c0_7], %11 {strides = array<i32>} : memref<16x128xf32, #tpu.memory_space<vmem>>, vector<16x128xf32>,
    return
  }
  func.func @transform_0(%arg0: i32) -> (i32, i32) {
    %c0_i32 = arith.constant 0 : i32
    %c0_i32_0 = arith.constant 0 : i32
    return %arg0, %c0_i32 : i32, i32
  }
  func.func @transform_1(%arg0: i32) -> (i32, i32) {
    %c0_i32 = arith.constant 0 : i32
    %c0_i32_0 = arith.constant 0 : i32
    return %arg0, %c0_i32 : i32, i32
  }
  func.func @transform_2(%arg0: i32) -> (i32, i32) {
    %c0_i32 = arith.constant 0 : i32
    %c0_i32_0 = arith.constant 0 : i32
    %c0_i32_1 = arith.constant 0 : i32
    return %c0_i32, %c0_i32_0 : i32, i32
  }
}

</mosaic_0001>

<llo_original>
// kernel: tpu_custom_call.1
$region0: #{tpu_custom_call.1}
  #allocation0 [shape = 'u32[]', space=smem, size = 0x4, offset = 0x4, fixed_abs, tag = 'smem constant byte address 0x4 - core index']
  #allocation1 [shape = 'u32[72,128]{1,0:T(1,128)}', space=vmem, size = 0x9000, scoped, tag = 'internal scratch']
  %s0 = inlined_call_operand.hbm [shape: f32[16,128], index: 0, kind: input, shape index: {}]
  %s1 = inlined_call_operand.hbm [shape: f32[16,128], index: 1, kind: input, shape index: {}]
  %s2 = inlined_call_operand.hbm [shape: f32[16,128], index: 2, kind: output, shape index: {}]
  %s3 = sld [smem:[#allocation0]]
  $region30: #{tpu_custom_call.1} parent=0
    _
  %s5 = ssub.s32 1, %s3
  %s6 = scalar_select 0, %s5, %s3
  $region1: #{tpu_custom_call.1} parent=0
    #allocation2 [shape = 'u8[8192]{0}', space=vmem, size = 0x2000, scoped, tag = 'input window, operand 0, single buffered']
    #allocation3 [shape = 's32[1]{0}', space=sflag, size = 0x4, scoped, tag = 'scoped memory for tpu_custom_call.1']
    #allocation4 [shape = 's32[1]{0}', space=sflag, size = 0x4, scoped, tag = 'scoped memory for tpu_custom_call.1']
    #allocation5 [shape = 'u8[8192]{0}', space=vmem, size = 0x2000, scoped, tag = 'input window, operand 1, single buffered']
    #allocation6 [shape = 's32[1]{0}', space=sflag, size = 0x4, scoped, tag = 'scoped memory for tpu_custom_call.1']
    #allocation7 [shape = 'u8[8192]{0}', space=vmem, size = 0x2000, scoped, tag = 'output window, operand 0, single buffered']
    %7 = vsyncpa [#allocation3], 0
    %8 = vsyncpa [#allocation6], 0
    %9 = vsyncpa [#allocation4], 0
    // Predicated region
    $region2: #{tpu_custom_call.1} parent=1 // pred_check
      _
    $region3: #{tpu_custom_call.1} parent=1 // pred_check_branch
      %11 = sbr.rel (0) target = $region5
    $region4: #{tpu_custom_call.1} parent=1 // pred_region
      %13 = vsyncadd [#allocation3], 0
      %s14 = sshll.u32 %s0, 4
      %s15 = int_to_ptr.hbm [resolvable:$true] %s14
      %s16 = sshll.u32 [#allocation2], 4
      %s17 = int_to_ptr.vmem [resolvable:$true] %s16
      %22 = dma.hbm_to_vmem [thread:$0]  %s15, 256, %s17, [#allocation3], 128, 128, 8
    $region5: #{tpu_custom_call.1} parent=1 // pred_fallthru
      _
    // Predicated region
    $region6: #{tpu_custom_call.1} parent=1 // pred_check
      _
    $region7: #{tpu_custom_call.1} parent=1 // pred_check_branch
      %24 = sbr.rel (0) target = $region9
    $region8: #{tpu_custom_call.1} parent=1 // pred_region
      %26 = vsyncadd [#allocation6], 0
      %s27 = sshll.u32 %s1, 4
      %s28 = int_to_ptr.hbm [resolvable:$true] %s27
      %s29 = sshll.u32 [#allocation5], 4
      %s30 = int_to_ptr.vmem [resolvable:$true] %s29
      %35 = dma.hbm_to_vmem [thread:$0]  %s28, 256, %s30, [#allocation6], 128, 128, 8
    $region9: #{tpu_custom_call.1} parent=1 // pred_fallthru
      _
    // Predicated region
    $region10: #{tpu_custom_call.1} parent=1 // pred_check
      _
    $region11: #{tpu_custom_call.1} parent=1 // pred_check_branch
      %37 = sbr.rel (0) target = $region13
    $region12: #{tpu_custom_call.1} parent=1 // pred_region
      %39 = dma.done [#allocation3], 256
    $region13: #{tpu_custom_call.1} parent=1 // pred_fallthru
      _
    // Predicated region
    $region14: #{tpu_custom_call.1} parent=1 // pred_check
      _
    $region15: #{tpu_custom_call.1} parent=1 // pred_check_branch
      %41 = sbr.rel (0) target = $region17
    $region16: #{tpu_custom_call.1} parent=1 // pred_region
      %43 = dma.done [#allocation6], 256
    $region17: #{tpu_custom_call.1} parent=1 // pred_fallthru
      _
    %v44 = vld [vmem:[#allocation2] sm:$0xff]
    %v45 = vld [vmem:[#allocation2 + $0x8] sm:$0xff]
    %v46 = vld [vmem:[#allocation5] sm:$0xff]
    %v47 = vld [vmem:[#allocation5 + $0x8] sm:$0xff]
    %v48 = vsub.f32 %v44, %v46
    %v49 = vsub.f32 %v45, %v47
    %v50 = vmul.f32 %v48, %v48
    %v51 = vmul.f32 %v49, %v49
    %v52 = vadd.f32 %v50, 1e-12
    %v53 = vadd.f32 %v51, 1e-12
    %v54 = vrsqrt.pop %v52
    %v55 = vmul.f32 %v54, %v52
    %v56 = vmul.f32 %v55, %v54
    %v57 = vmul.f32 0.5, %v56
    %v58 = vsub.f32 1.5, %v57
    %v59 = vmul.f32 %v54, %v58
    %v60 = vmul.f32 %v52, %v59
    %vm61 = vcmp.eq.f32.partialorder %v52, inf
    %v62 = vsel %vm61, %v52, %v60
    %vm63 = vcmp.eq.f32.partialorder %v52, 0.0
    %v64 = vand.u32 %v52, 2147483648
    %v65 = vsel %vm63, %v64, %v62
    %v66 = vrsqrt.pop %v53
    %v67 = vmul.f32 %v66, %v53
    %v68 = vmul.f32 %v67, %v66
    %v69 = vmul.f32 0.5, %v68
    %v70 = vsub.f32 1.5, %v69
    %v71 = vmul.f32 %v66, %v70
    %v72 = vmul.f32 %v53, %v71
    %vm73 = vcmp.eq.f32.partialorder %v53, inf
    %v74 = vsel %vm73, %v53, %v72
    %vm75 = vcmp.eq.f32.partialorder %v53, 0.0
    %v76 = vand.u32 %v53, 2147483648
    %v77 = vsel %vm75, %v76, %v74
    %p78 = scmp.eq.s32.totalorder 0, 0
    // Predicated region
    $region18: #{tpu_custom_call.1} parent=1 // pred_check
      %p79 = pneg %p78
    $region19: #{tpu_custom_call.1} parent=1 // pred_check_branch
      %81 = sbr.rel (%p79) target = $region21
    $region20: #{tpu_custom_call.1} parent=1 // pred_region
      %82 = vst [vmem:[#allocation7] sm:$0xff] 0.0
      %83 = vst [vmem:[#allocation7 + $0x8] sm:$0xff] 0.0
    $region21: #{tpu_custom_call.1} parent=1 // pred_fallthru
      _
    %v84 = vld [vmem:[#allocation7] sm:$0xff]
    %v85 = vld [vmem:[#allocation7 + $0x8] sm:$0xff]
    %v86 = vadd.f32 %v84, %v65
    %v87 = vadd.f32 %v85, %v77
    %88 = vst [vmem:[#allocation7] sm:$0xff] %v86
    %89 = vst [vmem:[#allocation7 + $0x8] sm:$0xff] %v87
    // Predicated region
    $region22: #{tpu_custom_call.1} parent=1 // pred_check
      _
    $region23: #{tpu_custom_call.1} parent=1 // pred_check_branch
      %91 = sbr.rel (0) target = $region25
    $region24: #{tpu_custom_call.1} parent=1 // pred_region
      %93 = vsyncadd [#allocation4], 0
      %s94 = sshll.u32 [#allocation7], 4
      %s95 = int_to_ptr.vmem [resolvable:$true] %s94
      %s96 = sshll.u32 %s2, 4
      %s97 = int_to_ptr.hbm [resolvable:$true] %s96
      %102 = dma.vmem_to_hbm [thread:$0]  %s95, 256, %s97, [#allocation4], 128, 128, 8
    $region25: #{tpu_custom_call.1} parent=1 // pred_fallthru
      _
    // Predicated region
    $region26: #{tpu_custom_call.1} parent=1 // pred_check
      _
    $region27: #{tpu_custom_call.1} parent=1 // pred_check_branch
      %104 = sbr.rel (0) target = $region29
    $region28: #{tpu_custom_call.1} parent=1 // pred_region
      %106 = dma.done [#allocation4], 256
    $region29: #{tpu_custom_call.1} parent=1 // pred_fallthru
      _
    %107 = vsyncpa [#allocation3], 1
    %108 = vsyncpa [#allocation6], 1
    %109 = vsyncpa [#allocation4], 1

</llo_original>
